<compile_context>
chip_gen: v7x
topology: tpu7x:2x2x1
jax: 0.10.0
libtpu: 0.0.40
codegen_flags: <defaults>
</compile_context>

<pallas_src>
import jax
import jax.numpy as jnp
from jax.experimental import pallas as pl
from jax.experimental.pallas import tpu as pltpu


_GATHER_ROWS = 8            # batch rows gathered per grid step (one row spec each)
_VMEM_LIMIT = 32 * 1024 * 1024


def _round_up(x, m):
    return (x + m - 1) // m * m


def _cdiv(a, b):
    return -(-a // b)


# --------------------------------------------------------------------------
# Parameter preparation (run once, not per forward call).
# --------------------------------------------------------------------------
def _pick_v_tile(vocab, e_pad, elem_bytes, target_tile_bytes=4 * 1024 * 1024):
    # Biggest vocab tile whose double-buffered DMA stays within budget, then
    # re-balanced so padding waste (V_pad - V) is minimal.
    rows_budget = max(8, target_tile_bytes // (e_pad * elem_bytes))
    num_tiles = max(1, _cdiv(vocab, rows_budget))
    return _round_up(_cdiv(vocab, num_tiles), 8)


def prepare_net_params(emb_table, fc1_weight, fc1_bias, seq_len,
                       table_dtype=jnp.float32):
    """Pads/transforms parameters once.  table_dtype=bf16 halves table HBM bytes."""
    V, E = emb_table.shape
    O = fc1_weight.shape[0]
    e_pad = _round_up(E, 128)
    o_pad = _round_up(O, 128)
    elem_bytes = jnp.dtype(table_dtype).itemsize
    v_tile = _pick_v_tile(V, e_pad, elem_bytes)
    v_pad = _round_up(V, v_tile)

    table = jnp.zeros((v_pad, e_pad), table_dtype)
    table = table.at[:V, :E].set(emb_table.astype(table_dtype))

    # Fold the 1/S mean into the fc1 weight (exact algebraically) and pad the
    # fc1 output to 128 lanes so the final store is lane-dense.
    w_t = jnp.zeros((e_pad, o_pad), jnp.float32)
    w_t = w_t.at[:E, :O].set(fc1_weight.astype(jnp.float32).T / seq_len)

    b2d = jnp.zeros((1, o_pad), jnp.float32)
    b2d = b2d.at[:, :O].set(fc1_bias.astype(jnp.float32))

    return {
        "table": table, "w_t": w_t, "b2d": b2d,
        "seq_len": seq_len, "vocab": V, "embed": E, "out_dim": O,
        "v_tile": v_tile, "e_pad": e_pad, "o_pad": o_pad,
    }


# --------------------------------------------------------------------------
# Gather path: DMA row-gather via scalar-prefetched token ids.
# --------------------------------------------------------------------------
def _make_gather_kernel(n_rows):
    def kernel(ids_sref, *refs):
        del ids_sref                       # consumed by the index_maps
        row_refs = refs[:n_rows]           # n_rows x (1, E_pad) gathered rows
        w_ref, b_ref, out_ref, acc_ref = refs[n_rows:]
        s = pl.program_id(1)

        @pl.when(s == 0)
        def _():
            acc_ref[...] = jnp.zeros_like(acc_ref)

        rows = jnp.concatenate(
            [r[...].astype(jnp.float32) for r in row_refs], axis=0)
        acc_ref[...] += rows               # (n_rows, E_pad) running sum over S

        @pl.when(s == pl.num_programs(1) - 1)
        def _():
            # fc1 on the pooled sums; 1/S already folded into w_ref.
            # (fc1 weight is small, so it is simply kept resident.)
            out_ref[...] = jnp.dot(acc_ref[...], w_ref[...],
                                   preferred_element_type=jnp.float32) + b_ref[...]
    return kernel


def _gather_call(ids, params):
    table, w_t, b2d = params["table"], params["w_t"], params["b2d"]
    _, e_pad = table.shape
    o_pad = w_t.shape[1]
    b_pad, seq = ids.shape
    n_rows = _GATHER_ROWS
    nb = b_pad // n_rows
    flat_ids = ids.reshape(-1)             # 1-D SMEM prefetch (minimal padding)

    row_specs = []
    for r in range(n_rows):
        def _imap(bb, s, ids_sref, _r=r):
            # element-offset row gather: row id of token (bb*n_rows+_r, s)
            return (ids_sref[(bb * n_rows + _r) * seq + s], 0)
        row_specs.append(pl.BlockSpec((pl.Element(1), e_pad), _imap))

    grid_spec = pltpu.PrefetchScalarGridSpec(
        num_scalar_prefetch=1,
        grid=(nb, seq),
        in_specs=row_specs + [
            pl.BlockSpec((e_pad, o_pad), lambda bb, s, ids_sref: (0, 0)),
            pl.BlockSpec((1, o_pad), lambda bb, s, ids_sref: (0, 0)),
        ],
        out_specs=pl.BlockSpec((n_rows, o_pad), lambda bb, s, ids_sref: (bb, 0)),
        scratch_shapes=[pltpu.VMEM((n_rows, e_pad), jnp.float32)],
    )

    return pl.pallas_call(
        _make_gather_kernel(n_rows),
        out_shape=jax.ShapeDtypeStruct((b_pad, o_pad), jnp.float32),
        grid_spec=grid_spec,
        compiler_params=pltpu.CompilerParams(
            dimension_semantics=("parallel", "arbitrary"),
            vmem_limit_bytes=_VMEM_LIMIT),
    )(flat_ids, *([table] * n_rows), w_t, b2d)


# --------------------------------------------------------------------------
# One-hot path: kept for tiny vocabularies (V within a few multiples of B*S).
# --------------------------------------------------------------------------
def _onehot_kernel(ids_ref, table_ref, w_ref, b_ref, out_ref, acc_ref):
    k = pl.program_id(1)
    nk = pl.num_programs(1)

    @pl.when(k == 0)
    def _():
        acc_ref[...] = jnp.zeros_like(acc_ref)

    b_tile, seq = ids_ref.shape
    v_tile = table_ref.shape[0]
    base = k * v_tile
    lane_ids = jax.lax.broadcasted_iota(jnp.int32, (b_tile, v_tile), 1) + base

    # counts[b, v] = #{s : ids[b, s] == v}, strictly 2-D (batch on sublanes,
    # vocab tile on lanes); S-reduction kept as a visible fori_loop.
    def body(s, counts):
        tok = ids_ref[:, pl.ds(s, 1)]                       # (b_tile, 1) int32
        return counts + (tok == lane_ids).astype(jnp.float32)

    counts = jax.lax.fori_loop(0, seq, body,
                               jnp.zeros((b_tile, v_tile), jnp.float32),
                               unroll=min(seq, 8))

    acc_ref[...] += jnp.dot(counts.astype(table_ref.dtype), table_ref[...],
                            preferred_element_type=jnp.float32)

    @pl.when(k == nk - 1)
    def _():
        out_ref[...] = jnp.dot(acc_ref[...], w_ref[...],
                               preferred_element_type=jnp.float32) + b_ref[...]


def _onehot_call(ids, params, b_tile):
    table, w_t, b2d = params["table"], params["w_t"], params["b2d"]
    v_pad, e_pad = table.shape
    o_pad = w_t.shape[1]
    b_pad, seq = ids.shape
    v_tile = params["v_tile"]
    num_v = v_pad // v_tile
    num_b = b_pad // b_tile

    return pl.pallas_call(
        _onehot_kernel,
        out_shape=jax.ShapeDtypeStruct((b_pad, o_pad), jnp.float32),
        grid=(num_b, num_v),
        in_specs=[
            pl.BlockSpec((b_tile, seq), lambda i, k: (i, 0)),    # ids (per batch block)
            pl.BlockSpec((v_tile, e_pad), lambda i, k: (k, 0)),  # table tile (pipelined)
            pl.BlockSpec((e_pad, o_pad), lambda i, k: (0, 0)),   # fc1 weight^T (resident)
            pl.BlockSpec((1, o_pad), lambda i, k: (0, 0)),       # fc1 bias
        ],
        out_specs=pl.BlockSpec((b_tile, o_pad), lambda i, k: (i, 0)),
        scratch_shapes=[pltpu.VMEM((b_tile, e_pad), jnp.float32)],
        compiler_params=pltpu.CompilerParams(
            dimension_semantics=("parallel", "arbitrary"),
            vmem_limit_bytes=_VMEM_LIMIT),
    )(ids, table, w_t, b2d)


# --------------------------------------------------------------------------
# Forward.
# --------------------------------------------------------------------------
def net_forward(text, params, path="auto"):
    """text: (B, S) int token ids; params: from prepare_net_params."""
    B, S = text.shape
    assert S == params["seq_len"], "seq_len mismatch with prepared params"
    V, O = params["vocab"], params["out_dim"]

    if path == "auto":
        path = "onehot" if V <= 4 * B * S else "gather"

    if path == "gather":
        b_tile = _GATHER_ROWS
    else:
        b_tile = min(_round_up(B, 8), 128)
    b_pad = _round_up(B, b_tile)

    ids = jnp.zeros((b_pad, S), jnp.int32).at[:B, :].set(text.astype(jnp.int32))

    if path == "gather":
        out = _gather_call(ids, params)
    else:
        out = _onehot_call(ids, params, b_tile)

    return out[:B, :O]


if __name__ == "__main__":
    # Small, module-consistent shapes.
    batch, seq_len = 2, 8
    vocab_size, embed_size, output_dim = 32, 32, 16

    key = jax.random.PRNGKey(0)
    k_ids, k_emb, k_w, k_b, k_ids2 = jax.random.split(key, 5)

    emb_table = jax.random.normal(k_emb, (vocab_size, embed_size), jnp.float32)
    lim = 1.0 / (embed_size ** 0.5)
    fc1_weight = jax.random.uniform(k_w, (output_dim, embed_size), jnp.float32,
                                    minval=-lim, maxval=lim)
    fc1_bias = jax.random.uniform(k_b, (output_dim,), jnp.float32,
                                  minval=-lim, maxval=lim)
    text = jax.random.randint(k_ids, (batch, seq_len), 0, vocab_size, jnp.int32)

    def reference(tok, table, w, b):
        embedded = jnp.take(table, tok, axis=0)     # (B, S, E)
        pooled = jnp.mean(embedded, axis=1)         # (B, E)
        return pooled @ w.T + b                     # (B, O)

    # --- small vocab: auto picks the one-hot path; also force the gather path.
    params = prepare_net_params(emb_table, fc1_weight, fc1_bias, seq_len)
    ref = reference(text, emb_table, fc1_weight, fc1_bias)

    out_onehot = jax.block_until_ready(net_forward(text, params))
    out_gather = jax.block_until_ready(net_forward(text, params, path="gather"))
    assert out_onehot.shape == (batch, output_dim)
    assert jnp.allclose(out_onehot, ref, atol=1e-5, rtol=1e-5)
    assert jnp.allclose(out_gather, ref, atol=1e-5, rtol=1e-5)

    # --- larger vocab: auto selects the DMA row-gather path (reads only B*S rows).
    big_vocab = 4096
    emb_big = jax.random.normal(k_emb, (big_vocab, embed_size), jnp.float32)
    text_big = jax.random.randint(k_ids2, (batch, seq_len), 0, big_vocab, jnp.int32)
    params_big = prepare_net_params(emb_big, fc1_weight, fc1_bias, seq_len)
    ref_big = reference(text_big, emb_big, fc1_weight, fc1_bias)
    out_big = jax.block_until_ready(net_forward(text_big, params_big))
    assert jnp.allclose(out_big, ref_big, atol=1e-5, rtol=1e-5)

    # --- bf16 table variant (halves table HBM traffic); looser numerics expected.
    params_bf16 = prepare_net_params(emb_big, fc1_weight, fc1_bias, seq_len,
                                     table_dtype=jnp.bfloat16)
    out_bf16 = jax.block_until_ready(net_forward(text_big, params_bf16))
    assert jnp.allclose(out_bf16, ref_big, atol=5e-2, rtol=5e-2)

    print("KERNEL_OK")
</pallas_src>

<mosaic_0001>
module attributes {stable_mosaic.version = 11 : i64} {
  func.func @_onehot_kernel(%arg0: i32, %arg1: i32, %arg2: memref<8x8xi32, #tpu.memory_space<vmem>>, %arg3: memref<32x128xf32, #tpu.memory_space<vmem>>, %arg4: memref<128x128xf32, #tpu.memory_space<vmem>>, %arg5: memref<1x128xf32, #tpu.memory_space<vmem>>, %arg6: memref<8x128xf32, #tpu.memory_space<vmem>>, %arg7: memref<8x128xf32, #tpu.memory_space<vmem>>) attributes {dimension_semantics = [#tpu.dimension_semantics<parallel>, #tpu.dimension_semantics<arbitrary>], iteration_bounds = array<i64: 1, 1>, scalar_prefetch = 0 : i64, scratch_operands = 1 : i64, tpu.core_type = #tpu.core_type<tc>, window_params = [{transform_indices = @transform_0, window_bounds = array<i64: 8, 8>}, {transform_indices = @transform_1, window_bounds = array<i64: 32, 128>}, {pipeline_mode = #tpu.pipeline_mode<synchronous>, transform_indices = @transform_2, window_bounds = array<i64: 128, 128>}, {pipeline_mode = #tpu.pipeline_mode<synchronous>, transform_indices = @transform_3, window_bounds = array<i64: 1, 128>}, {transform_indices = @transform_4, window_bounds = array<i64: 8, 128>}]} {
    %c0_i32 = arith.constant 0 : i32
    %0 = arith.cmpi eq, %arg1, %c0_i32 : i32
    %1 = arith.extui %0 : i1 to i32
    %c0_i32_0 = arith.constant 0 : i32
    %2 = arith.cmpi ne, %1, %c0_i32_0 : i32
    scf.if %2 {
      %cst_18 = arith.constant 0.000000e+00 : f32
      %72 = vector.broadcast %cst_18 : f32 to vector<8x128xf32>
      %c0_19 = arith.constant 0 : index
      %c0_20 = arith.constant 0 : index
      %73 = vector.load %arg7[%c0_19, %c0_20] : memref<8x128xf32, #tpu.memory_space<vmem>>, vector<8x128xf32>
      tpu.vector_store %arg7[%c0_19, %c0_20], %72 {strides = array<i32>} : memref<8x128xf32, #tpu.memory_space<vmem>>, vector<8x128xf32>,
    } else {
    }
    %c32_i32 = arith.constant 32 : i32
    %3 = arith.muli %arg1, %c32_i32 : i32
    %4 = tpu.iota {dimensions = array<i32: 1>} : vector<8x32xi32>
    %5 = vector.broadcast %3 : i32 to vector<8x32xi32>
    %6 = arith.addi %4, %5 : vector<8x32xi32>
    %cst = arith.constant 0.000000e+00 : f32
    %7 = vector.broadcast %cst : f32 to vector<8x32xf32>
    %c0_i32_1 = arith.constant 0 : i32
    %c0 = arith.constant 0 : index
    %8 = arith.index_cast %c0_i32_1 : i32 to index
    %9 = vector.load %arg2[%c0, %8] : memref<8x8xi32, #tpu.memory_space<vmem>>, vector<8x1xi32>
    %10 = vector.broadcast %9 : vector<8x1xi32> to vector<8x32xi32>
    %11 = arith.cmpi eq, %10, %6 : vector<8x32xi32>
    %12 = arith.extui %11 : vector<8x32xi1> to vector<8x32xi32>
    %13 = arith.sitofp %12 : vector<8x32xi32> to vector<8x32xf32>
    %14 = arith.addf %7, %13 : vector<8x32xf32>
    %c1_i32 = arith.constant 1 : i32
    %c0_2 = arith.constant 0 : index
    %15 = arith.index_cast %c1_i32 : i32 to index
    %16 = vector.load %arg2[%c0_2, %15] : memref<8x8xi32, #tpu.memory_space<vmem>>, vector<8x1xi32>
    %17 = vector.broadcast %16 : vector<8x1xi32> to vector<8x32xi32>
    %18 = arith.cmpi eq, %17, %6 : vector<8x32xi32>
    %19 = arith.extui %18 : vector<8x32xi1> to vector<8x32xi32>
    %20 = arith.sitofp %19 : vector<8x32xi32> to vector<8x32xf32>
    %21 = arith.addf %14, %20 : vector<8x32xf32>
    %c2_i32 = arith.constant 2 : i32
    %c0_3 = arith.constant 0 : index
    %22 = arith.index_cast %c2_i32 : i32 to index
    %23 = vector.load %arg2[%c0_3, %22] : memref<8x8xi32, #tpu.memory_space<vmem>>, vector<8x1xi32>
    %24 = vector.broadcast %23 : vector<8x1xi32> to vector<8x32xi32>
    %25 = arith.cmpi eq, %24, %6 : vector<8x32xi32>
    %26 = arith.extui %25 : vector<8x32xi1> to vector<8x32xi32>
    %27 = arith.sitofp %26 : vector<8x32xi32> to vector<8x32xf32>
    %28 = arith.addf %21, %27 : vector<8x32xf32>
    %c3_i32 = arith.constant 3 : i32
    %c0_4 = arith.constant 0 : index
    %29 = arith.index_cast %c3_i32 : i32 to index
    %30 = vector.load %arg2[%c0_4, %29] : memref<8x8xi32, #tpu.memory_space<vmem>>, vector<8x1xi32>
    %31 = vector.broadcast %30 : vector<8x1xi32> to vector<8x32xi32>
    %32 = arith.cmpi eq, %31, %6 : vector<8x32xi32>
    %33 = arith.extui %32 : vector<8x32xi1> to vector<8x32xi32>
    %34 = arith.sitofp %33 : vector<8x32xi32> to vector<8x32xf32>
    %35 = arith.addf %28, %34 : vector<8x32xf32>
    %c4_i32 = arith.constant 4 : i32
    %c0_5 = arith.constant 0 : index
    %36 = arith.index_cast %c4_i32 : i32 to index
    %37 = vector.load %arg2[%c0_5, %36] : memref<8x8xi32, #tpu.memory_space<vmem>>, vector<8x1xi32>
    %38 = vector.broadcast %37 : vector<8x1xi32> to vector<8x32xi32>
    %39 = arith.cmpi eq, %38, %6 : vector<8x32xi32>
    %40 = arith.extui %39 : vector<8x32xi1> to vector<8x32xi32>
    %41 = arith.sitofp %40 : vector<8x32xi32> to vector<8x32xf32>
    %42 = arith.addf %35, %41 : vector<8x32xf32>
    %c5_i32 = arith.constant 5 : i32
    %c0_6 = arith.constant 0 : index
    %43 = arith.index_cast %c5_i32 : i32 to index
    %44 = vector.load %arg2[%c0_6, %43] : memref<8x8xi32, #tpu.memory_space<vmem>>, vector<8x1xi32>
    %45 = vector.broadcast %44 : vector<8x1xi32> to vector<8x32xi32>
    %46 = arith.cmpi eq, %45, %6 : vector<8x32xi32>
    %47 = arith.extui %46 : vector<8x32xi1> to vector<8x32xi32>
    %48 = arith.sitofp %47 : vector<8x32xi32> to vector<8x32xf32>
    %49 = arith.addf %42, %48 : vector<8x32xf32>
    %c6_i32 = arith.constant 6 : i32
    %c0_7 = arith.constant 0 : index
    %50 = arith.index_cast %c6_i32 : i32 to index
    %51 = vector.load %arg2[%c0_7, %50] : memref<8x8xi32, #tpu.memory_space<vmem>>, vector<8x1xi32>
    %52 = vector.broadcast %51 : vector<8x1xi32> to vector<8x32xi32>
    %53 = arith.cmpi eq, %52, %6 : vector<8x32xi32>
    %54 = arith.extui %53 : vector<8x32xi1> to vector<8x32xi32>
    %55 = arith.sitofp %54 : vector<8x32xi32> to vector<8x32xf32>
    %56 = arith.addf %49, %55 : vector<8x32xf32>
    %c7_i32 = arith.constant 7 : i32
    %c0_8 = arith.constant 0 : index
    %57 = arith.index_cast %c7_i32 : i32 to index
    %58 = vector.load %arg2[%c0_8, %57] : memref<8x8xi32, #tpu.memory_space<vmem>>, vector<8x1xi32>
    %59 = vector.broadcast %58 : vector<8x1xi32> to vector<8x32xi32>
    %60 = arith.cmpi eq, %59, %6 : vector<8x32xi32>
    %61 = arith.extui %60 : vector<8x32xi1> to vector<8x32xi32>
    %62 = arith.sitofp %61 : vector<8x32xi32> to vector<8x32xf32>
    %63 = arith.addf %56, %62 : vector<8x32xf32>
    %c8_i32 = arith.constant 8 : i32
    %c0_9 = arith.constant 0 : index
    %c0_10 = arith.constant 0 : index
    %64 = vector.load %arg7[%c0_9, %c0_10] : memref<8x128xf32, #tpu.memory_space<vmem>>, vector<8x128xf32>
    %c0_11 = arith.constant 0 : index
    %c0_12 = arith.constant 0 : index
    %65 = vector.load %arg3[%c0_11, %c0_12] : memref<32x128xf32, #tpu.memory_space<vmem>>, vector<32x128xf32>
    %cst_13 = arith.constant dense<0.000000e+00> : vector<8x128xf32>
    %66 = tpu.matmul %63, %65, %cst_13 {dimension_numbers = #tpu.dot_dimension_numbers<[1], [0], [0], [1], [0, 0, 1, 1], [], []>} : vector<8x32xf32>, vector<32x128xf32>, vector<8x128xf32> -> vector<8x128xf32>
    %67 = arith.addf %64, %66 : vector<8x128xf32>
    %c0_14 = arith.constant 0 : index
    %c0_15 = arith.constant 0 : index
    %68 = vector.load %arg7[%c0_14, %c0_15] : memref<8x128xf32, #tpu.memory_space<vmem>>, vector<8x128xf32>
    tpu.vector_store %arg7[%c0_14, %c0_15], %67 {strides = array<i32>} : memref<8x128xf32, #tpu.memory_space<vmem>>, vector<8x128xf32>,
    %c0_i32_16 = arith.constant 0 : i32
    %69 = arith.cmpi eq, %arg1, %c0_i32_16 : i32
    %70 = arith.extui %69 : i1 to i32
    %c0_i32_17 = arith.constant 0 : i32
    %71 = arith.cmpi ne, %70, %c0_i32_17 : i32
    scf.if %71 {
      %c0_18 = arith.constant 0 : index
      %c0_19 = arith.constant 0 : index
      %72 = vector.load %arg7[%c0_18, %c0_19] : memref<8x128xf32, #tpu.memory_space<vmem>>, vector<8x128xf32>
      %c0_20 = arith.constant 0 : index
      %c0_21 = arith.constant 0 : index
      %73 = vector.load %arg4[%c0_20, %c0_21] : memref<128x128xf32, #tpu.memory_space<vmem>>, vector<128x128xf32>
      %cst_22 = arith.constant dense<0.000000e+00> : vector<8x128xf32>
      %74 = tpu.matmul %72, %73, %cst_22 {dimension_numbers = #tpu.dot_dimension_numbers<[1], [0], [0], [1], [0, 0, 1, 1], [], []>} : vector<8x128xf32>, vector<128x128xf32>, vector<8x128xf32> -> vector<8x128xf32>
      %c0_23 = arith.constant 0 : index
      %c0_24 = arith.constant 0 : index
      %75 = vector.load %arg5[%c0_23, %c0_24] : memref<1x128xf32, #tpu.memory_space<vmem>>, vector<1x128xf32>
      %76 = vector.broadcast %75 : vector<1x128xf32> to vector<8x128xf32>
      %77 = arith.addf %74, %76 : vector<8x128xf32>
      %c0_25 = arith.constant 0 : index
      %c0_26 = arith.constant 0 : index
      %78 = vector.load %arg6[%c0_25, %c0_26] : memref<8x128xf32, #tpu.memory_space<vmem>>, vector<8x128xf32>
      tpu.vector_store %arg6[%c0_25, %c0_26], %77 {strides = array<i32>} : memref<8x128xf32, #tpu.memory_space<vmem>>, vector<8x128xf32>,
    } else {
    }
    return
  }
  func.func @transform_0(%arg0: i32, %arg1: i32) -> (i32, i32) {
    %c0_i32 = arith.constant 0 : i32
    %c0_i32_0 = arith.constant 0 : i32
    return %arg0, %c0_i32 : i32, i32
  }
  func.func @transform_1(%arg0: i32, %arg1: i32) -> (i32, i32) {
    %c0_i32 = arith.constant 0 : i32
    %c0_i32_0 = arith.constant 0 : i32
    return %arg1, %c0_i32 : i32, i32
  }
  func.func @transform_2(%arg0: i32, %arg1: i32) -> (i32, i32) {
    %c0_i32 = arith.constant 0 : i32
    %c0_i32_0 = arith.constant 0 : i32
    %c0_i32_1 = arith.constant 0 : i32
    return %c0_i32, %c0_i32_0 : i32, i32
  }
  func.func @transform_3(%arg0: i32, %arg1: i32) -> (i32, i32) {
    %c0_i32 = arith.constant 0 : i32
    %c0_i32_0 = arith.constant 0 : i32
    %c0_i32_1 = arith.constant 0 : i32
    return %c0_i32, %c0_i32_0 : i32, i32
  }
  func.func @transform_4(%arg0: i32, %arg1: i32) -> (i32, i32) {
    %c0_i32 = arith.constant 0 : i32
    %c0_i32_0 = arith.constant 0 : i32
    return %arg0, %c0_i32 : i32, i32
  }
}

</mosaic_0001>

<llo_original>
// kernel: tpu_custom_call.1
$region0: #{tpu_custom_call.1}
  #allocation0 [shape = 'u32[]', space=smem, size = 0x4, offset = 0x4, fixed_abs, tag = 'smem constant byte address 0x4 - core index']
  #allocation1 [shape = 'u32[144,128]{1,0:T(1,128)}', space=vmem, size = 0x12000, scoped, tag = 'internal scratch']
  #allocation2 [shape = 'f32[8,128]{1,0:T(8,128)}', space=vmem, size = 0x1000, scoped, tag = 'scratch operand']
  %s0 = inlined_call_operand.hbm [shape: s32[8,8], index: 0, kind: input, shape index: {}]
  %s1 = inlined_call_operand.hbm [shape: f32[32,128], index: 1, kind: input, shape index: {}]
  %s2 = inlined_call_operand.hbm [shape: f32[128,128], index: 2, kind: input, shape index: {}]
  %s3 = inlined_call_operand.vmem [shape: f32[1,128], index: 3, kind: input, shape index: {}]
  %s4 = inlined_call_operand.hbm [shape: f32[8,128], index: 4, kind: output, shape index: {}]
  %s5 = sld [smem:[#allocation0]]
  $region46: #{tpu_custom_call.1} parent=0
    _
  %s7 = ssub.s32 1, %s5
  %s8 = scalar_select 0, %s7, %s5
  $region1: #{tpu_custom_call.1} parent=0
    #allocation3 [shape = 'u8[4096]{0}', space=vmem, size = 0x1000, scoped, tag = 'input window, operand 0, single buffered']
    #allocation4 [shape = 's32[1]{0}', space=sflag, size = 0x4, scoped, tag = 'scoped memory for tpu_custom_call.1']
    #allocation5 [shape = 's32[1]{0}', space=sflag, size = 0x4, scoped, tag = 'scoped memory for tpu_custom_call.1']
    #allocation6 [shape = 'u8[16384]{0}', space=vmem, size = 0x4000, scoped, tag = 'input window, operand 1, single buffered']
    #allocation7 [shape = 's32[1]{0}', space=sflag, size = 0x4, scoped, tag = 'scoped memory for tpu_custom_call.1']
    #allocation8 [shape = 'u8[65536]{0}', space=vmem, size = 0x10000, scoped, tag = 'input window, operand 2, single buffered']
    #allocation9 [shape = 'u8[4096]{0}', space=vmem, size = 0x1000, scoped, tag = 'output window, operand 0, single buffered']
    %9 = vsyncpa [#allocation4], 0
    %10 = vsyncpa [#allocation7], 0
    %11 = vsyncpa [#allocation5], 0
    // Predicated region
    $region2: #{tpu_custom_call.1} parent=1 // pred_check
      _
    $region3: #{tpu_custom_call.1} parent=1 // pred_check_branch
      %13 = sbr.rel (0) target = $region5
    $region4: #{tpu_custom_call.1} parent=1 // pred_region
      %s15 = ssub.s32 128, 128
      %16 = vsyncadd [#allocation4], %s15
      %s18 = sshll.u32 [#allocation3], 4
      %s19 = int_to_ptr.vmem [resolvable:$true] %s18
      %21 = dma.hbm_to_vmem [thread:$0]  %s0, 128, %s19, [#allocation4]
    $region5: #{tpu_custom_call.1} parent=1 // pred_fallthru
      _
    // Predicated region
    $region6: #{tpu_custom_call.1} parent=1 // pred_check
      _
    $region7: #{tpu_custom_call.1} parent=1 // pred_check_branch
      %23 = sbr.rel (0) target = $region9
    $region8: #{tpu_custom_call.1} parent=1 // pred_region
      %s25 = ssub.s32 512, 512
      %26 = vsyncadd [#allocation7], %s25
      %s27 = sshll.u32 [#allocation6], 4
      %s28 = int_to_ptr.vmem [resolvable:$true] %s27
      %33 = dma.hbm_to_vmem [thread:$0]  %s1, 512, %s28, [#allocation7], 128, 128, 8
    $region9: #{tpu_custom_call.1} parent=1 // pred_fallthru
      _
    // Predicated region
    $region10: #{tpu_custom_call.1} parent=1 // pred_check
      _
    $region11: #{tpu_custom_call.1} parent=1 // pred_check_branch
      %35 = sbr.rel (0) target = $region13
    $region12: #{tpu_custom_call.1} parent=1 // pred_region
      %s37 = ssub.s32 2048, 2048
      %38 = vsyncadd [#allocation7], %s37
      %s39 = sshll.u32 [#allocation8], 4
      %s40 = int_to_ptr.vmem [resolvable:$true] %s39
      %45 = dma.hbm_to_vmem [thread:$0]  %s2, 2048, %s40, [#allocation7], 128, 128, 8
    $region13: #{tpu_custom_call.1} parent=1 // pred_fallthru
      _
    // Predicated region
    $region14: #{tpu_custom_call.1} parent=1 // pred_check
      _
    $region15: #{tpu_custom_call.1} parent=1 // pred_check_branch
      %47 = sbr.rel (0) target = $region17
    $region16: #{tpu_custom_call.1} parent=1 // pred_region
      _
    $region17: #{tpu_custom_call.1} parent=1 // pred_fallthru
      _
    // Predicated region
    $region18: #{tpu_custom_call.1} parent=1 // pred_check
      _
    $region19: #{tpu_custom_call.1} parent=1 // pred_check_branch
      %49 = sbr.rel (0) target = $region21
    $region20: #{tpu_custom_call.1} parent=1 // pred_region
      %50 = dma.done [#allocation4], 128
    $region21: #{tpu_custom_call.1} parent=1 // pred_fallthru
      _
    // Predicated region
    $region22: #{tpu_custom_call.1} parent=1 // pred_check
      _
    $region23: #{tpu_custom_call.1} parent=1 // pred_check_branch
      %52 = sbr.rel (0) target = $region25
    $region24: #{tpu_custom_call.1} parent=1 // pred_region
      %53 = dma.done [#allocation7], 512
    $region25: #{tpu_custom_call.1} parent=1 // pred_fallthru
      _
    // Predicated region
    $region26: #{tpu_custom_call.1} parent=1 // pred_check
      _
    $region27: #{tpu_custom_call.1} parent=1 // pred_check_branch
      %55 = sbr.rel (0) target = $region29
    $region28: #{tpu_custom_call.1} parent=1 // pred_region
      %56 = dma.done [#allocation7], 2048
    $region29: #{tpu_custom_call.1} parent=1 // pred_fallthru
      _
    %p57 = scmp.eq.s32.totalorder 0, 0
    // Predicated region
    $region30: #{tpu_custom_call.1} parent=1 // pred_check
      %p58 = pneg %p57
    $region31: #{tpu_custom_call.1} parent=1 // pred_check_branch
      %60 = sbr.rel (%p58) target = $region33
    $region32: #{tpu_custom_call.1} parent=1 // pred_region
      %61 = vst [vmem:[#allocation2] sm:$0xff] 0.0
    $region33: #{tpu_custom_call.1} parent=1 // pred_fallthru
      _
    %s62 = smul.u32 0, 32
    %v63 = vlaneseq
    %v64 = vand.u32 %v63, 127
    %v65 = vstv %s62
    %v66 = vadd.s32 %v64, %v65
    %v67 = vld [vmem:[#allocation3] sm:$0xff]
    %68 = vset.pattern.permute.xlu0 0
    %69 = vperm.xlu0 %68, %v67
    %v70 = vpop.permute.xlu0 %69
    %vm71 = vcmp.eq.s32.totalorder %v70, %v66
    %v72 = vsel %vm71, 1, 0
    %v73 = vcvt.s32.f32 %v72
    %v74 = vadd.f32 %v73, 0.0
    %75 = vset.pattern.permute.xlu0 1
    %76 = vperm.xlu0 %75, %v67
    %v77 = vpop.permute.xlu0 %76
    %vm78 = vcmp.eq.s32.totalorder %v77, %v66
    %v79 = vsel %vm78, 1, 0
    %v80 = vcvt.s32.f32 %v79
    %v81 = vadd.f32 %v74, %v80
    %82 = vset.pattern.permute.xlu0 2
    %83 = vperm.xlu0 %82, %v67
    %v84 = vpop.permute.xlu0 %83
    %vm85 = vcmp.eq.s32.totalorder %v84, %v66
    %v86 = vsel %vm85, 1, 0
    %v87 = vcvt.s32.f32 %v86
    %v88 = vadd.f32 %v81, %v87
    %89 = vset.pattern.permute.xlu0 3
    %90 = vperm.xlu0 %89, %v67
    %v91 = vpop.permute.xlu0 %90
    %vm92 = vcmp.eq.s32.totalorder %v91, %v66
    %v93 = vsel %vm92, 1, 0
    %v94 = vcvt.s32.f32 %v93
    %v95 = vadd.f32 %v88, %v94
    %96 = vset.pattern.permute.xlu0 4
    %97 = vperm.xlu0 %96, %v67
    %v98 = vpop.permute.xlu0 %97
    %vm99 = vcmp.eq.s32.totalorder %v98, %v66
    %v100 = vsel %vm99, 1, 0
    %v101 = vcvt.s32.f32 %v100
    %v102 = vadd.f32 %v95, %v101
    %103 = vset.pattern.permute.xlu0 5
    %104 = vperm.xlu0 %103, %v67
    %v105 = vpop.permute.xlu0 %104
    %vm106 = vcmp.eq.s32.totalorder %v105, %v66
    %v107 = vsel %vm106, 1, 0
    %v108 = vcvt.s32.f32 %v107
    %v109 = vadd.f32 %v102, %v108
    %110 = vset.pattern.permute.xlu0 6
    %111 = vperm.xlu0 %110, %v67
    %v112 = vpop.permute.xlu0 %111
    %vm113 = vcmp.eq.s32.totalorder %v112, %v66
    %v114 = vsel %vm113, 1, 0
    %v115 = vcvt.s32.f32 %v114
    %v116 = vadd.f32 %v109, %v115
    %117 = vset.pattern.permute.xlu0 7
    %118 = vperm.xlu0 %117, %v67
    %v119 = vpop.permute.xlu0 %118
    %vm120 = vcmp.eq.s32.totalorder %v119, %v66
    %v121 = vsel %vm120, 1, 0
    %v122 = vcvt.s32.f32 %v121
    %v123 = vadd.f32 %v116, %v122
    %v124 = vld [vmem:[#allocation2] sm:$0xff]
    %v125 = vld [vmem:[#allocation6] sm:$0xff]
    %v126 = vld [vmem:[#allocation6 + $0x8] sm:$0xff]
    %v127 = vld [vmem:[#allocation6 + $0x10] sm:$0xff]
    %v128 = vld [vmem:[#allocation6 + $0x18] sm:$0xff]
    %vm129 = vcmask 261120
    %v131 = vsel %vm129, %v123, 0
    %133 = vmatprep.subr.mxu0 0.0
    %134 = vmatpush1.msra.mxu0 %v125
    %135 = vmatprep.subr.mxu0 0.0
    %136 = vmatpush1.msra.mxu0 %v126
    %137 = vmatprep.subr.mxu0 0.0
    %138 = vmatpush1.msra.mxu0 %v127
    %139 = vmatprep.subr.mxu0 0.0
    %140 = vmatpush1.msra.mxu0 %v128
    %141 = vmatprep.subr.mxu0 0.0
    %142 = vmatpush1.msra.mxu0 0.0
    %143 = vmatprep.subr.mxu0 0.0
    %144 = vmatpush1.msra.mxu0 0.0
    %145 = vmatprep.subr.mxu0 0.0
    %146 = vmatpush1.msra.mxu0 0.0
    %147 = vmatprep.subr.mxu0 0.0
    %148 = vmatpush1.msra.mxu0 0.0
    %149 = vmatprep.subr.mxu0 0.0
    %150 = vmatpush1.msra.mxu0 0.0
    %151 = vmatprep.subr.mxu0 0.0
    %152 = vmatpush1.msra.mxu0 0.0
    %153 = vmatprep.subr.mxu0 0.0
    %154 = vmatpush1.msra.mxu0 0.0
    %155 = vmatprep.subr.mxu0 0.0
    %156 = vmatpush1.msra.mxu0 0.0
    %157 = vmatprep.subr.mxu0 0.0
    %158 = vmatpush1.msra.mxu0 0.0
    %159 = vmatprep.subr.mxu0 0.0
    %160 = vmatpush1.msra.mxu0 0.0
    %161 = vmatprep.subr.mxu0 0.0
    %162 = vmatpush1.msra.mxu0 0.0
    %163 = vmatprep.subr.mxu0 0.0
    %164 = vmatpush1.msra.mxu0 0.0
    %165 = vmatprep.subr.mxu0 0.0
    %166 = vmatpush1.msra.mxu0 0.0
    %167 = vmatprep.subr.mxu0 0.0
    %168 = vmatpush1.msra.mxu0 0.0
    %169 = vmatprep.subr.mxu0 0.0
    %170 = vmatpush1.msra.mxu0 0.0
    %171 = vmatprep.subr.mxu0 0.0
    %172 = vmatpush1.msra.mxu0 0.0
    %173 = vmatprep.subr.mxu0 0.0
    %174 = vmatpush1.msra.mxu0 0.0
    %175 = vmatprep.subr.mxu0 0.0
    %176 = vmatpush1.msra.mxu0 0.0
    %177 = vmatprep.subr.mxu0 0.0
    %178 = vmatpush1.msra.mxu0 0.0
    %179 = vmatprep.subr.mxu0 0.0
    %180 = vmatpush1.msra.mxu0 0.0
    %181 = vmatprep.subr.mxu0 0.0
    %182 = vmatpush1.msra.mxu0 0.0
    %183 = vmatprep.subr.mxu0 0.0
    %184 = vmatpush1.msra.mxu0 0.0
    %185 = vmatprep.subr.mxu0 0.0
    %186 = vmatpush1.msra.mxu0 0.0
    %187 = vmatprep.subr.mxu0 0.0
    %188 = vmatpush1.msra.mxu0 0.0
    %189 = vmatprep.subr.mxu0 0.0
    %190 = vmatpush1.msra.mxu0 0.0
    %191 = vmatprep.subr.mxu0 0.0
    %192 = vmatpush1.msra.mxu0 0.0
    %193 = vmatprep.subr.mxu0 0.0
    %194 = vmatpush1.msra.mxu0 0.0
    %195 = vmatprep.subr.mxu0 0.0
    %196 = vmatpush1.msra.mxu0 0.0
    %197 = vmatprep.mubr.f32.mxu0 0.0
    %198 = vmatmul.mubr.f32.gmra.mrb[0].mxu0 %v131
    %v199 = vpop.f32.mrb[0].mxu0
    %v200 = vadd.f32 0.0, %v199
    %v201 = vpop.f32.mrb[0].mxu0
    %202 = vdwg.mxu0
    %v203 = vadd.f32 %v124, %v200
    %204 = vst [vmem:[#allocation2] sm:$0xff] %v203
    // Predicated region
    $region34: #{tpu_custom_call.1} parent=1 // pred_check
      %p205 = pneg %p57
    $region35: #{tpu_custom_call.1} parent=1 // pred_check_branch
      %207 = sbr.rel (%p205) target = $region37
    $region36: #{tpu_custom_call.1} parent=1 // pred_region
      %v208 = vld [vmem:[#allocation2] sm:$0xff]
      %v209 = vld [vmem:[#allocation8] sm:$0xff]
      %v210 = vld [vmem:[#allocation8 + $0x8] sm:$0xff]
      %v211 = vld [vmem:[#allocation8 + $0x10] sm:$0xff]
      %v212 = vld [vmem:[#allocation8 + $0x18] sm:$0xff]
      %v213 = vld [vmem:[#allocation8 + $0x20] sm:$0xff]
      %v214 = vld [vmem:[#allocation8 + $0x28] sm:$0xff]
      %v215 = vld [vmem:[#allocation8 + $0x30] sm:$0xff]
      %v216 = vld [vmem:[#allocation8 + $0x38] sm:$0xff]
      %v217 = vld [vmem:[#allocation8 + $0x40] sm:$0xff]
      %v218 = vld [vmem:[#allocation8 + $0x48] sm:$0xff]
      %v219 = vld [vmem:[#allocation8 + $0x50] sm:$0xff]
      %v220 = vld [vmem:[#allocation8 + $0x58] sm:$0xff]
      %v221 = vld [vmem:[#allocation8 + $0x60] sm:$0xff]
      %v222 = vld [vmem:[#allocation8 + $0x68] sm:$0xff]
      %v223 = vld [vmem:[#allocation8 + $0x70] sm:$0xff]
      %v224 = vld [vmem:[#allocation8 + $0x78] sm:$0xff]
      %v225 = vld [vmem:[%s3] sm:$0x1]
      %v227 = vlaneseq
      %v228 = vshrl.u32 %v227, 7
      %v229 = vsub.s32 0, %v228
      %v230 = vrot.slane %v225, %v229
      %232 = vmatprep.subr.mxu0 0.0
      %233 = vmatpush1.msra.mxu0 %v209
      %234 = vmatprep.subr.mxu0 0.0
      %235 = vmatpush1.msra.mxu0 %v210
      %236 = vmatprep.subr.mxu0 0.0
      %237 = vmatpush1.msra.mxu0 %v211
      %238 = vmatprep.subr.mxu0 0.0
      %239 = vmatpush1.msra.mxu0 %v212
      %240 = vmatprep.subr.mxu0 0.0
      %241 = vmatpush1.msra.mxu0 %v213
      %242 = vmatprep.subr.mxu0 0.0
      %243 = vmatpush1.msra.mxu0 %v214
      %244 = vmatprep.subr.mxu0 0.0
      %245 = vmatpush1.msra.mxu0 %v215
      %246 = vmatprep.subr.mxu0 0.0
      %247 = vmatpush1.msra.mxu0 %v216
      %248 = vmatprep.subr.mxu0 0.0
      %249 = vmatpush1.msra.mxu0 %v217
      %250 = vmatprep.subr.mxu0 0.0
      %251 = vmatpush1.msra.mxu0 %v218
      %252 = vmatprep.subr.mxu0 0.0
      %253 = vmatpush1.msra.mxu0 %v219
      %254 = vmatprep.subr.mxu0 0.0
      %255 = vmatpush1.msra.mxu0 %v220
      %256 = vmatprep.subr.mxu0 0.0
      %257 = vmatpush1.msra.mxu0 %v221
      %258 = vmatprep.subr.mxu0 0.0
      %259 = vmatpush1.msra.mxu0 %v222
      %260 = vmatprep.subr.mxu0 0.0
      %261 = vmatpush1.msra.mxu0 %v223
      %262 = vmatprep.subr.mxu0 0.0
      %263 = vmatpush1.msra.mxu0 %v224
      %264 = vmatprep.subr.mxu0 0.0
      %265 = vmatpush1.msra.mxu0 0.0
      %266 = vmatprep.subr.mxu0 0.0
      %267 = vmatpush1.msra.mxu0 0.0
      %268 = vmatprep.subr.mxu0 0.0
      %269 = vmatpush1.msra.mxu0 0.0
      %270 = vmatprep.subr.mxu0 0.0
      %271 = vmatpush1.msra.mxu0 0.0
      %272 = vmatprep.subr.mxu0 0.0
      %273 = vmatpush1.msra.mxu0 0.0
      %274 = vmatprep.subr.mxu0 0.0
      %275 = vmatpush1.msra.mxu0 0.0
      %276 = vmatprep.subr.mxu0 0.0
      %277 = vmatpush1.msra.mxu0 0.0
      %278 = vmatprep.subr.mxu0 0.0
      %279 = vmatpush1.msra.mxu0 0.0
      %280 = vmatprep.subr.mxu0 0.0
      %281 = vmatpush1.msra.mxu0 0.0
      %282 = vmatprep.subr.mxu0 0.0
      %283 = vmatpush1.msra.mxu0 0.0
      %284 = vmatprep.subr.mxu0 0.0
      %285 = vmatpush1.msra.mxu0 0.0
      %286 = vmatprep.subr.mxu0 0.0
      %287 = vmatpush1.msra.mxu0 0.0
      %288 = vmatprep.subr.mxu0 0.0
      %289 = vmatpush1.msra.mxu0 0.0
      %290 = vmatprep.subr.mxu0 0.0
      %291 = vmatpush1.msra.mxu0 0.0
      %292 = vmatprep.subr.mxu0 0.0
      %293 = vmatpush1.msra.mxu0 0.0
      %294 = vmatprep.subr.mxu0 0.0
      %295 = vmatpush1.msra.mxu0 0.0
      %296 = vmatprep.mubr.f32.mxu0 0.0
      %297 = vmatmul.mubr.f32.gmra.mrb[0].mxu0 %v208
      %v298 = vpop.f32.mrb[0].mxu0
      %v299 = vadd.f32 %v230, %v298
      %v300 = vpop.f32.mrb[0].mxu0
      %301 = vdwg.mxu0
      %302 = vst [vmem:[#allocation9] sm:$0xff] %v299
    $region37: #{tpu_custom_call.1} parent=1 // pred_fallthru
      _
    // Predicated region
    $region38: #{tpu_custom_call.1} parent=1 // pred_check
      _
    $region39: #{tpu_custom_call.1} parent=1 // pred_check_branch
      %304 = sbr.rel (0) target = $region41
    $region40: #{tpu_custom_call.1} parent=1 // pred_region
      %s306 = ssub.s32 128, 128
      %307 = vsyncadd [#allocation5], %s306
      %s309 = sshll.u32 [#allocation9], 4
      %s310 = int_to_ptr.vmem [resolvable:$true] %s309
      %312 = dma.vmem_to_hbm [thread:$0]  %s310, 128, %s4, [#allocation5]
    $region41: #{tpu_custom_call.1} parent=1 // pred_fallthru
      _
    // Predicated region
    $region42: #{tpu_custom_call.1} parent=1 // pred_check
      _
    $region43: #{tpu_custom_call.1} parent=1 // pred_check_branch
      %314 = sbr.rel (0) target = $region45
    $region44: #{tpu_custom_call.1} parent=1 // pred_region
      %315 = dma.done [#allocation5], 128
    $region45: #{tpu_custom_call.1} parent=1 // pred_fallthru
      _
    %316 = vsyncpa [#allocation4], 1
    %317 = vsyncpa [#allocation7], 1
    %318 = vsyncpa [#allocation5], 1

</llo_original>
